<compile_context>
chip_gen: v7x
topology: tpu7x:2x2x1
jax: 0.10.0
libtpu: 0.0.40
codegen_flags: <defaults>
</compile_context>

<pallas_src>
import jax
import jax.numpy as jnp
from jax.experimental import pallas as pl
from jax.experimental.pallas import tpu as pltpu


def _multi_channel_neuron_kernel(xc_ref, xb_ref, wc_ref, wb_ref, bias_ref, out_ref):
    # xc_ref, xb_ref : VMEM (tb, lane_dim)   lane-packed color / brightness tiles
    #                  (row r holds `pack` consecutive original batch rows).
    # wc_ref, wb_ref : VMEM (lane_dim, 2*pack) block-diagonal weights; color weights
    #                  occupy columns [0, pack), brightness columns [pack, 2*pack);
    #                  each matrix is zero in the other channel's columns, so the two
    #                  MXU dots simply add into one accumulator.
    # bias_ref       : VMEM (1, 2*pack)  [color_bias]*pack ++ [brightness_bias]*pack
    # out_ref        : VMEM (tb, 2*pack) fused lane-packed output.
    xc = xc_ref[...].astype(jnp.float32)
    xb = xb_ref[...].astype(jnp.float32)
    acc = jnp.dot(xc, wc_ref[...], preferred_element_type=jnp.float32)
    acc = acc + jnp.dot(xb, wb_ref[...], preferred_element_type=jnp.float32)
    # TODO(synk): only the module's default 'relu' activation is implemented here;
    # sigmoid/tanh/leaky_relu/elu/gelu would need their jnp equivalents.
    out_ref[...] = jnp.maximum(acc + bias_ref[...], 0.0).astype(out_ref.dtype)


def multi_channel_neuron(color_inputs, brightness_inputs,
                         color_weights, brightness_weights,
                         color_bias=None, brightness_bias=None,
                         *, block_rows=4096):
    """Pallas implementation of MultiChannelNeuron.forward (relu activation).

    color_inputs, brightness_inputs  : (B, D) float
    color_weights, brightness_weights: (D,)   float
    color_bias, brightness_bias      : scalar / (1,) float, or None for no bias
    Returns (color_out, brightness_out), each (B,) float32.
    """
    B, D = color_inputs.shape
    assert brightness_inputs.shape == (B, D)

    # Lane packing: fold `pack` consecutive batch rows into one 128-lane row so VMEM
    # tiles are lane-dense.  The reshape of a contiguous (B, D) array is free in HBM.
    pack = 128 // D if (D <= 128 and 128 % D == 0) else 1
    lane_dim = D * pack
    out_cols = 2 * pack

    b_pad = ((B + pack - 1) // pack) * pack
    if b_pad != B:
        pad_cfg = ((0, b_pad - B), (0, 0))
        color_inputs = jnp.pad(color_inputs, pad_cfg)
        brightness_inputs = jnp.pad(brightness_inputs, pad_cfg)
    rows = b_pad // pack
    xc4 = color_inputs.reshape(rows, lane_dim)
    xb4 = brightness_inputs.reshape(rows, lane_dim)

    # Block-diagonal weights (tiny, built at call time): column j of the color block
    # holds the weight vector at lanes [j*D, (j+1)*D); brightness occupies the next
    # `pack` columns; zeros elsewhere so the two per-channel dots just add.
    wc = jnp.asarray(color_weights, jnp.float32).reshape(D, 1)
    wb = jnp.asarray(brightness_weights, jnp.float32).reshape(D, 1)
    eye = jnp.eye(pack, dtype=jnp.float32)
    wc_bd = jnp.kron(eye, wc)                                   # (lane_dim, pack)
    wb_bd = jnp.kron(eye, wb)                                   # (lane_dim, pack)
    zeros = jnp.zeros((lane_dim, pack), jnp.float32)
    wc_full = jnp.concatenate([wc_bd, zeros], axis=1)           # (lane_dim, 2*pack)
    wb_full = jnp.concatenate([zeros, wb_bd], axis=1)           # (lane_dim, 2*pack)

    bc = (jnp.float32(0.0) if color_bias is None
          else jnp.asarray(color_bias, jnp.float32).reshape(()))
    bb = (jnp.float32(0.0) if brightness_bias is None
          else jnp.asarray(brightness_bias, jnp.float32).reshape(()))
    bias_row = jnp.concatenate([jnp.full((pack,), bc, jnp.float32),
                                jnp.full((pack,), bb, jnp.float32)]).reshape(1, out_cols)

    # Batch tiling (in packed rows).  Guarantee >= 2 grid steps whenever possible so
    # the "parallel" batch axis can shard across both TensorCores on v7x; keep tiles
    # a multiple of 8 sublanes.  Default 4096 rows -> 2 MiB/input/buffer (~10 MiB peak).
    block_rows = max(8, (block_rows // 8) * 8)
    if rows <= 8:
        tb = rows                                   # single full block
    else:
        half_rows = (((rows + 1) // 2) + 7) // 8 * 8
        tb = max(8, min(block_rows, half_rows))
    grid = (pl.cdiv(rows, tb),)

    out = pl.pallas_call(
        _multi_channel_neuron_kernel,
        out_shape=jax.ShapeDtypeStruct((rows, out_cols), jnp.float32),
        grid=grid,
        in_specs=[
            pl.BlockSpec((tb, lane_dim), lambda i: (i, 0)),        # color tile
            pl.BlockSpec((tb, lane_dim), lambda i: (i, 0)),        # brightness tile
            pl.BlockSpec((lane_dim, out_cols), lambda i: (0, 0)),  # color weights (resident)
            pl.BlockSpec((lane_dim, out_cols), lambda i: (0, 0)),  # brightness weights
            pl.BlockSpec((1, out_cols), lambda i: (0, 0)),         # fused bias row
        ],
        out_specs=pl.BlockSpec((tb, out_cols), lambda i: (i, 0)),  # lane-packed output
        compiler_params=pltpu.CompilerParams(
            dimension_semantics=("parallel",),       # shard batch across v7x TCs
            vmem_limit_bytes=32 * 1024 * 1024,       # ample headroom on v5e/v6e/v7x
        ),
    )(xc4, xb4, wc_full, wb_full, bias_row)

    color_out = out[:, :pack].reshape(b_pad)[:B]
    brightness_out = out[:, pack:].reshape(b_pad)[:B]
    return color_out, brightness_out


def _reference(xc, xb, wc, wb, bc, bb):
    c = jnp.maximum(xc @ wc + bc, 0.0)
    b = jnp.maximum(xb @ wb + bb, 0.0)
    return c, b


if __name__ == "__main__":
    key = jax.random.PRNGKey(0)
    k1, k2, k3, k4 = jax.random.split(key, 4)

    # Small shapes consistent with the module (input_size=32).
    B, D = 512, 32
    color_inputs = jax.random.normal(k1, (B, D), dtype=jnp.float32)
    brightness_inputs = jax.random.normal(k2, (B, D), dtype=jnp.float32)

    # nn.Parameter(torch.randn(D) * 0.01) analogue; non-zero biases to exercise the
    # bias path (the module initializes them to zero but they are trainable).
    color_weights = jax.random.normal(k3, (D,), dtype=jnp.float32) * 0.01
    brightness_weights = jax.random.normal(k4, (D,), dtype=jnp.float32) * 0.01
    color_bias = jnp.array([0.1], jnp.float32)
    brightness_bias = jnp.array([-0.05], jnp.float32)

    out_c, out_b = multi_channel_neuron(
        color_inputs, brightness_inputs,
        color_weights, brightness_weights,
        color_bias, brightness_bias)
    jax.block_until_ready((out_c, out_b))

    ref_c, ref_b = _reference(color_inputs, brightness_inputs,
                              color_weights, brightness_weights,
                              color_bias[0], brightness_bias[0])
    assert out_c.shape == (B,) and out_b.shape == (B,)
    assert jnp.allclose(out_c, ref_c, atol=1e-5), "color output mismatch"
    assert jnp.allclose(out_b, ref_b, atol=1e-5), "brightness output mismatch"

    # Odd batch: exercises batch padding (B % pack != 0) and a partial last grid tile.
    B2 = 37
    xc2 = jax.random.normal(k1, (B2, D), dtype=jnp.float32)
    xb2 = jax.random.normal(k2, (B2, D), dtype=jnp.float32)
    oc2, ob2 = multi_channel_neuron(xc2, xb2, color_weights, brightness_weights,
                                    color_bias, brightness_bias)
    jax.block_until_ready((oc2, ob2))
    rc2, rb2 = _reference(xc2, xb2, color_weights, brightness_weights,
                          color_bias[0], brightness_bias[0])
    assert oc2.shape == (B2,) and ob2.shape == (B2,)
    assert jnp.allclose(oc2, rc2, atol=1e-5), "color output mismatch (odd batch)"
    assert jnp.allclose(ob2, rb2, atol=1e-5), "brightness output mismatch (odd batch)"

    print("KERNEL_OK")
</pallas_src>

<mosaic_0001>
module attributes {stable_mosaic.version = 11 : i64} {
  func.func @_multi_channel_neuron_kernel(%arg0: i32, %arg1: memref<64x128xf32, #tpu.memory_space<vmem>>, %arg2: memref<64x128xf32, #tpu.memory_space<vmem>>, %arg3: memref<128x8xf32, #tpu.memory_space<vmem>>, %arg4: memref<128x8xf32, #tpu.memory_space<vmem>>, %arg5: memref<1x8xf32, #tpu.memory_space<vmem>>, %arg6: memref<64x8xf32, #tpu.memory_space<vmem>>) attributes {dimension_semantics = [#tpu.dimension_semantics<parallel>], iteration_bounds = array<i64: 2>, scalar_prefetch = 0 : i64, scratch_operands = 0 : i64, tpu.core_type = #tpu.core_type<tc>, window_params = [{transform_indices = @transform_0, window_bounds = array<i64: 64, 128>}, {transform_indices = @transform_1, window_bounds = array<i64: 64, 128>}, {pipeline_mode = #tpu.pipeline_mode<synchronous>, transform_indices = @transform_2, window_bounds = array<i64: 128, 8>}, {pipeline_mode = #tpu.pipeline_mode<synchronous>, transform_indices = @transform_3, window_bounds = array<i64: 128, 8>}, {pipeline_mode = #tpu.pipeline_mode<synchronous>, transform_indices = @transform_4, window_bounds = array<i64: 1, 8>}, {transform_indices = @transform_5, window_bounds = array<i64: 64, 8>}]} {
    %c0 = arith.constant 0 : index
    %c0_0 = arith.constant 0 : index
    %0 = vector.load %arg1[%c0, %c0_0] : memref<64x128xf32, #tpu.memory_space<vmem>>, vector<64x128xf32>
    %c0_1 = arith.constant 0 : index
    %c0_2 = arith.constant 0 : index
    %1 = vector.load %arg2[%c0_1, %c0_2] : memref<64x128xf32, #tpu.memory_space<vmem>>, vector<64x128xf32>
    %c0_3 = arith.constant 0 : index
    %c0_4 = arith.constant 0 : index
    %2 = vector.load %arg3[%c0_3, %c0_4] : memref<128x8xf32, #tpu.memory_space<vmem>>, vector<128x8xf32>
    %cst = arith.constant dense<0.000000e+00> : vector<64x8xf32>
    %3 = tpu.matmul %0, %2, %cst {dimension_numbers = #tpu.dot_dimension_numbers<[1], [0], [0], [1], [0, 0, 1, 1], [], []>} : vector<64x128xf32>, vector<128x8xf32>, vector<64x8xf32> -> vector<64x8xf32>
    %c0_5 = arith.constant 0 : index
    %c0_6 = arith.constant 0 : index
    %4 = vector.load %arg4[%c0_5, %c0_6] : memref<128x8xf32, #tpu.memory_space<vmem>>, vector<128x8xf32>
    %cst_7 = arith.constant dense<0.000000e+00> : vector<64x8xf32>
    %5 = tpu.matmul %1, %4, %cst_7 {dimension_numbers = #tpu.dot_dimension_numbers<[1], [0], [0], [1], [0, 0, 1, 1], [], []>} : vector<64x128xf32>, vector<128x8xf32>, vector<64x8xf32> -> vector<64x8xf32>
    %6 = arith.addf %3, %5 : vector<64x8xf32>
    %c0_8 = arith.constant 0 : index
    %c0_9 = arith.constant 0 : index
    %7 = vector.load %arg5[%c0_8, %c0_9] : memref<1x8xf32, #tpu.memory_space<vmem>>, vector<1x8xf32>
    %8 = vector.broadcast %7 : vector<1x8xf32> to vector<64x8xf32>
    %9 = arith.addf %6, %8 : vector<64x8xf32>
    %cst_10 = arith.constant 0.000000e+00 : f32
    %10 = vector.broadcast %cst_10 : f32 to vector<64x8xf32>
    %11 = arith.maximumf %9, %10 : vector<64x8xf32>
    %c0_11 = arith.constant 0 : index
    %c0_12 = arith.constant 0 : index
    %12 = vector.load %arg6[%c0_11, %c0_12] : memref<64x8xf32, #tpu.memory_space<vmem>>, vector<64x8xf32>
    tpu.vector_store %arg6[%c0_11, %c0_12], %11 {strides = array<i32>} : memref<64x8xf32, #tpu.memory_space<vmem>>, vector<64x8xf32>,
    return
  }
  func.func @transform_0(%arg0: i32) -> (i32, i32) {
    %c0_i32 = arith.constant 0 : i32
    %c0_i32_0 = arith.constant 0 : i32
    return %arg0, %c0_i32 : i32, i32
  }
  func.func @transform_1(%arg0: i32) -> (i32, i32) {
    %c0_i32 = arith.constant 0 : i32
    %c0_i32_0 = arith.constant 0 : i32
    return %arg0, %c0_i32 : i32, i32
  }
  func.func @transform_2(%arg0: i32) -> (i32, i32) {
    %c0_i32 = arith.constant 0 : i32
    %c0_i32_0 = arith.constant 0 : i32
    %c0_i32_1 = arith.constant 0 : i32
    return %c0_i32, %c0_i32_0 : i32, i32
  }
  func.func @transform_3(%arg0: i32) -> (i32, i32) {
    %c0_i32 = arith.constant 0 : i32
    %c0_i32_0 = arith.constant 0 : i32
    %c0_i32_1 = arith.constant 0 : i32
    return %c0_i32, %c0_i32_0 : i32, i32
  }
  func.func @transform_4(%arg0: i32) -> (i32, i32) {
    %c0_i32 = arith.constant 0 : i32
    %c0_i32_0 = arith.constant 0 : i32
    %c0_i32_1 = arith.constant 0 : i32
    return %c0_i32, %c0_i32_0 : i32, i32
  }
  func.func @transform_5(%arg0: i32) -> (i32, i32) {
    %c0_i32 = arith.constant 0 : i32
    %c0_i32_0 = arith.constant 0 : i32
    return %arg0, %c0_i32 : i32, i32
  }
}

</mosaic_0001>

<llo_original>
// kernel: tpu_custom_call.1
$region0: #{tpu_custom_call.1}
  #allocation0 [shape = 'u32[]', space=smem, size = 0x4, offset = 0x4, fixed_abs, tag = 'smem constant byte address 0x4 - core index']
  #allocation1 [shape = 'u32[144,128]{1,0:T(1,128)}', space=vmem, size = 0x12000, scoped, tag = 'internal scratch']
  %s0 = inlined_call_operand.vmem [shape: f32[128,128], index: 0, kind: input, shape index: {}]
  %s1 = inlined_call_operand.vmem [shape: f32[128,128], index: 1, kind: input, shape index: {}]
  %s2 = inlined_call_operand.vmem [shape: f32[128,8], index: 2, kind: input, shape index: {}]
  %s3 = inlined_call_operand.vmem [shape: f32[128,8], index: 3, kind: input, shape index: {}]
  %s4 = inlined_call_operand.vmem [shape: f32[1,8], index: 4, kind: input, shape index: {}]
  %s5 = inlined_call_operand.vmem [shape: f32[128,8], index: 5, kind: output, shape index: {}]
  %s6 = sld [smem:[#allocation0]]
  $region53: #{tpu_custom_call.1} parent=0
    _
  %s8 = ssub.s32 1, %s6
  %s9 = scalar_select 0, %s8, %s6
  loop: start=0, step=1, limit=4
  $region2: #{tpu_custom_call.1} parent=0 // loop_pre_header
    _
  $region3: #{tpu_custom_call.1} parent=0 // loop_header
    %s11 = sphi 0, %s15
    %p12 = scmp.ge.s32.totalorder %s11, 4
    %s21 = sphi 0, %s23
    %s24 = sphi 0, %s21
    %s25 = sphi 0, %s24
    %s41 = sphi 0, %s25
    %s47 = sphi 0, %s49
    %s50 = sphi 0, %s47
    %s51 = sphi 0, %s50
    %s67 = sphi 0, %s51
    %s71 = sphi 0, %s71
    %s73 = sphi 0, %s71
    %s74 = sphi 0, %s73
    %s88 = sphi 0, %s74
    %s92 = sphi 0, %s92
    %s94 = sphi 0, %s92
    %s95 = sphi 0, %s94
    %s109 = sphi 0, %s95
    %s113 = sphi 0, %s113
    %s115 = sphi 0, %s113
    %s116 = sphi 0, %s115
    %s130 = sphi 0, %s116
    %s136 = sphi 0, %s138
    %s139 = sphi 0, %s136
    %s140 = sphi 0, %s139
    %s156 = sphi 0, %s140
  $region4: #{tpu_custom_call.1} parent=0 // loop_header_branch
    %14 = sbr.rel (%p12) target = $region8
  $region5: #{tpu_custom_call.1} parent=0 // loop_body
    %s16 = ssub.s32 %s11, 1
    %s17 = ssub.s32 %s11, 2
    %s18 = sadd.s32 %s11, 1
    %s19 = ssub.s32 %s11, %s18
    %p20 = scmp.eq.s32.totalorder %s19, 0
    %s22 = sadd.s32 %s21, 1
    %s23 = scalar_select %p20, %s21, %s22
    %p26 = pneg %p20
    %p27 = scmp.eq.s32.totalorder %s11, 1
    %p28 = por %p26, %p27
    %p29 = scmp.ne.s32.totalorder %s21, %s24
    %p30 = scmp.eq.s32.totalorder %s11, 0
    %p31 = por %p29, %p30
    %p32 = scmp.ne.s32.totalorder %s21, %s24
    %p33 = scmp.eq.s32.totalorder %s16, 1
    %p34 = por %p32, %p33
    %p35 = scmp.ne.s32.totalorder %s24, %s25
    %p36 = scmp.eq.s32.totalorder %s16, 0
    %p37 = por %p35, %p36
    %p38 = scmp.ne.s32.totalorder %s24, %s25
    %p39 = scmp.eq.s32.totalorder %s17, 1
    %p40 = por %p38, %p39
    %p42 = scmp.ne.s32.totalorder %s25, %s41
    %p43 = scmp.eq.s32.totalorder %s17, 0
    %p44 = por %p42, %p43
    %s45 = ssub.s32 %s11, %s18
    %p46 = scmp.eq.s32.totalorder %s45, 0
    %s48 = sadd.s32 %s47, 1
    %s49 = scalar_select %p46, %s47, %s48
    %p52 = pneg %p46
    %p53 = scmp.eq.s32.totalorder %s11, 1
    %p54 = por %p52, %p53
    %p55 = scmp.ne.s32.totalorder %s47, %s50
    %p56 = scmp.eq.s32.totalorder %s11, 0
    %p57 = por %p55, %p56
    %p58 = scmp.ne.s32.totalorder %s47, %s50
    %p59 = scmp.eq.s32.totalorder %s16, 1
    %p60 = por %p58, %p59
    %p61 = scmp.ne.s32.totalorder %s50, %s51
    %p62 = scmp.eq.s32.totalorder %s16, 0
    %p63 = por %p61, %p62
    %p64 = scmp.ne.s32.totalorder %s50, %s51
    %p65 = scmp.eq.s32.totalorder %s17, 1
    %p66 = por %p64, %p65
    %p68 = scmp.ne.s32.totalorder %s51, %s67
    %p69 = scmp.eq.s32.totalorder %s17, 0
    %p70 = por %p68, %p69
    %s72 = sadd.s32 %s71, 1
    %p75 = scmp.eq.s32.totalorder %s11, 1
    %p76 = scmp.ne.s32.totalorder %s71, %s73
    %p77 = scmp.eq.s32.totalorder %s11, 0
    %p78 = por %p76, %p77
    %p79 = scmp.ne.s32.totalorder %s71, %s73
    %p80 = scmp.eq.s32.totalorder %s16, 1
    %p81 = por %p79, %p80
    %p82 = scmp.ne.s32.totalorder %s73, %s74
    %p83 = scmp.eq.s32.totalorder %s16, 0
    %p84 = por %p82, %p83
    %p85 = scmp.ne.s32.totalorder %s73, %s74
    %p86 = scmp.eq.s32.totalorder %s17, 1
    %p87 = por %p85, %p86
    %p89 = scmp.ne.s32.totalorder %s74, %s88
    %p90 = scmp.eq.s32.totalorder %s17, 0
    %p91 = por %p89, %p90
    %s93 = sadd.s32 %s92, 1
    %p96 = scmp.eq.s32.totalorder %s11, 1
    %p97 = scmp.ne.s32.totalorder %s92, %s94
    %p98 = scmp.eq.s32.totalorder %s11, 0
    %p99 = por %p97, %p98
    %p100 = scmp.ne.s32.totalorder %s92, %s94
    %p101 = scmp.eq.s32.totalorder %s16, 1
    %p102 = por %p100, %p101
    %p103 = scmp.ne.s32.totalorder %s94, %s95
    %p104 = scmp.eq.s32.totalorder %s16, 0
    %p105 = por %p103, %p104
    %p106 = scmp.ne.s32.totalorder %s94, %s95
    %p107 = scmp.eq.s32.totalorder %s17, 1
    %p108 = por %p106, %p107
    %p110 = scmp.ne.s32.totalorder %s95, %s109
    %p111 = scmp.eq.s32.totalorder %s17, 0
    %p112 = por %p110, %p111
    %s114 = sadd.s32 %s113, 1
    %p117 = scmp.eq.s32.totalorder %s11, 1
    %p118 = scmp.ne.s32.totalorder %s113, %s115
    %p119 = scmp.eq.s32.totalorder %s11, 0
    %p120 = por %p118, %p119
    %p121 = scmp.ne.s32.totalorder %s113, %s115
    %p122 = scmp.eq.s32.totalorder %s16, 1
    %p123 = por %p121, %p122
    %p124 = scmp.ne.s32.totalorder %s115, %s116
    %p125 = scmp.eq.s32.totalorder %s16, 0
    %p126 = por %p124, %p125
    %p127 = scmp.ne.s32.totalorder %s115, %s116
    %p128 = scmp.eq.s32.totalorder %s17, 1
    %p129 = por %p127, %p128
    %p131 = scmp.ne.s32.totalorder %s116, %s130
    %p132 = scmp.eq.s32.totalorder %s17, 0
    %p133 = por %p131, %p132
    %s134 = ssub.s32 %s11, %s18
    %p135 = scmp.eq.s32.totalorder %s134, 0
    %s137 = sadd.s32 %s136, 1
    %s138 = scalar_select %p135, %s136, %s137
    %p141 = pneg %p135
    %p142 = scmp.eq.s32.totalorder %s11, 1
    %p143 = por %p141, %p142
    %p144 = scmp.ne.s32.totalorder %s136, %s139
    %p145 = scmp.eq.s32.totalorder %s11, 0
    %p146 = por %p144, %p145
    %p147 = scmp.ne.s32.totalorder %s136, %s139
    %p148 = scmp.eq.s32.totalorder %s16, 1
    %p149 = por %p147, %p148
    %p150 = scmp.ne.s32.totalorder %s139, %s140
    %p151 = scmp.eq.s32.totalorder %s16, 0
    %p152 = por %p150, %p151
    %p153 = scmp.ne.s32.totalorder %s139, %s140
    %p154 = scmp.eq.s32.totalorder %s17, 1
    %p155 = por %p153, %p154
    %p157 = scmp.ne.s32.totalorder %s140, %s156
    %p158 = scmp.eq.s32.totalorder %s17, 0
    %p159 = por %p157, %p158
    %p160 = scmp.le.s32.totalorder 1, %s11
    %p161 = scmp.lt.s32.totalorder %s11, 3
    %p162 = pnand %p160, %p161
    %p163 = pneg %p162
    // Predicated region
    $region9: #{tpu_custom_call.1} parent=5 // pred_check
      _
    $region10: #{tpu_custom_call.1} parent=5 // pred_check_branch
      %165 = sbr.rel (%p162) target = $region12
    $region11: #{tpu_custom_call.1} parent=5 // pred_region
      %s166 = ssub.s32 %s11, 1
      // Predicated region
      $region13: #{tpu_custom_call.1} parent=11 // pred_check
        %p167 = pneg %p84
      $region14: #{tpu_custom_call.1} parent=11 // pred_check_branch
        %169 = sbr.rel (%p167) target = $region16
      $region15: #{tpu_custom_call.1} parent=11 // pred_region
        _
      $region16: #{tpu_custom_call.1} parent=11 // pred_fallthru
        _
      // Predicated region
      $region17: #{tpu_custom_call.1} parent=11 // pred_check
        %p170 = pneg %p105
      $region18: #{tpu_custom_call.1} parent=11 // pred_check_branch
        %172 = sbr.rel (%p170) target = $region20
      $region19: #{tpu_custom_call.1} parent=11 // pred_region
        _
      $region20: #{tpu_custom_call.1} parent=11 // pred_fallthru
        _
      // Predicated region
      $region21: #{tpu_custom_call.1} parent=11 // pred_check
        %p173 = pneg %p126
      $region22: #{tpu_custom_call.1} parent=11 // pred_check_branch
        %175 = sbr.rel (%p173) target = $region24
      $region23: #{tpu_custom_call.1} parent=11 // pred_region
        _
      $region24: #{tpu_custom_call.1} parent=11 // pred_fallthru
        _
    $region12: #{tpu_custom_call.1} parent=5 // pred_fallthru
      _
    %p176 = scmp.lt.s32.totalorder %s11, 2
    // Predicated region
    $region25: #{tpu_custom_call.1} parent=5 // pred_check
      %p177 = pneg %p176
    $region26: #{tpu_custom_call.1} parent=5 // pred_check_branch
      %179 = sbr.rel (%p177) target = $region28
    $region27: #{tpu_custom_call.1} parent=5 // pred_region
      // Predicated region
      $region29: #{tpu_custom_call.1} parent=27 // pred_check
        %p180 = pneg %p31
      $region30: #{tpu_custom_call.1} parent=27 // pred_check_branch
        %182 = sbr.rel (%p180) target = $region32
      $region31: #{tpu_custom_call.1} parent=27 // pred_region
        %s183 = smul.u32 8, %s11
        %p184 = scmp.lt.s32.totalorder %s183, 15
        %s185 = scalar_select %p184, %s183, 15
        %s186 = smul.addr %s185, 8
        %s187 = scalar_lea.vmem %s0, %s186
        %s188 = smul.u32 8, %s11
      $region32: #{tpu_custom_call.1} parent=27 // pred_fallthru
        _
      // Predicated region
      $region33: #{tpu_custom_call.1} parent=27 // pred_check
        %p189 = pneg %p57
      $region34: #{tpu_custom_call.1} parent=27 // pred_check_branch
        %191 = sbr.rel (%p189) target = $region36
      $region35: #{tpu_custom_call.1} parent=27 // pred_region
        %s192 = smul.u32 8, %s11
        %p193 = scmp.lt.s32.totalorder %s192, 15
        %s194 = scalar_select %p193, %s192, 15
        %s195 = smul.addr %s194, 8
        %s196 = scalar_lea.vmem %s1, %s195
        %s197 = smul.u32 8, %s11
      $region36: #{tpu_custom_call.1} parent=27 // pred_fallthru
        _
    $region28: #{tpu_custom_call.1} parent=5 // pred_fallthru
      _
    %p198 = scmp.le.s32.totalorder 1, %s11
    %p199 = scmp.lt.s32.totalorder %s11, 3
    %p200 = pnand %p198, %p199
    %p201 = pneg %p200
    // Predicated region
    $region37: #{tpu_custom_call.1} parent=5 // pred_check
      _
    $region38: #{tpu_custom_call.1} parent=5 // pred_check_branch
      %203 = sbr.rel (%p200) target = $region40
    $region39: #{tpu_custom_call.1} parent=5 // pred_region
      %s204 = ssub.s32 %s11, 1
      %s205 = smul.u32 8, %s16
      %p206 = scmp.lt.s32.totalorder %s205, 15
      %s207 = scalar_select %p206, %s205, 15
      %s208 = smul.addr %s207, 8
      %s209 = scalar_lea.vmem %s0, %s208
      %p210 = pneg %p37
      %p211 = pneg %p34
      %s212 = smul.u32 8, %s16
      %p213 = scmp.lt.s32.totalorder %s212, 15
      %s214 = scalar_select %p213, %s212, 15
      %s215 = smul.addr %s214, 8
      %s216 = scalar_lea.vmem %s1, %s215
      %p217 = pneg %p63
      %p218 = pneg %p60
      %p219 = pneg %p84
      %p220 = pneg %p81
      %p221 = pneg %p105
      %p222 = pneg %p102
      %p223 = pneg %p126
      %p224 = pneg %p123
      %p225 = pneg %p152
      %p226 = pneg %p149
      %s227 = smul.u32 8, %s16
      %p228 = scmp.lt.s32.totalorder %s227, 15
      %s229 = scalar_select %p228, %s227, 15
      %s230 = smul.addr %s229, 8
      %s231 = scalar_lea.vmem %s5, %s230
      %s232 = smul.u32 8, %s16
      %p233 = scmp.lt.s32.totalorder %s232, 15
      %s234 = scalar_select %p233, %s232, 15
      %s235 = smul.addr %s234, 8
      %s236 = scalar_lea.vmem %s0, %s235
      %s237 = smul.u32 8, %s16
      %s238 = smul.u32 8, %s16
      %p239 = scmp.lt.s32.totalorder %s238, 15
      %s240 = scalar_select %p239, %s238, 15
      %s241 = smul.addr %s240, 8
      %s242 = scalar_lea.vmem %s1, %s241
      %s243 = smul.u32 8, %s16
      %s244 = smul.u32 8, %s16
      %p245 = scmp.lt.s32.totalorder %s244, 15
      %s246 = scalar_select %p245, %s244, 15
      %s247 = smul.addr %s246, 8
      %s248 = scalar_lea.vmem %s5, %s247
      %s249 = smul.u32 8, %s16
      %v250 = vld [vmem:[%s236] sm:$0xff]
      %v251 = vld [vmem:[%s236 + $0x8] sm:$0xff]
      %v252 = vld [vmem:[%s236 + $0x10] sm:$0xff]
      %v253 = vld [vmem:[%s236 + $0x18] sm:$0xff]
      %v254 = vld [vmem:[%s236 + $0x20] sm:$0xff]
      %v255 = vld [vmem:[%s236 + $0x28] sm:$0xff]
      %v256 = vld [vmem:[%s236 + $0x30] sm:$0xff]
      %v257 = vld [vmem:[%s236 + $0x38] sm:$0xff]
      %v258 = vld [vmem:[%s242] sm:$0xff]
      %v259 = vld [vmem:[%s242 + $0x8] sm:$0xff]
      %v260 = vld [vmem:[%s242 + $0x10] sm:$0xff]
      %v261 = vld [vmem:[%s242 + $0x18] sm:$0xff]
      %v262 = vld [vmem:[%s242 + $0x20] sm:$0xff]
      %v263 = vld [vmem:[%s242 + $0x28] sm:$0xff]
      %v264 = vld [vmem:[%s242 + $0x30] sm:$0xff]
      %v265 = vld [vmem:[%s242 + $0x38] sm:$0xff]
      %v266 = vld [vmem:[%s2] sm:$0xff]
      %v267 = vld [vmem:[%s2 + $0x8] sm:$0xff]
      %v268 = vld [vmem:[%s2 + $0x10] sm:$0xff]
      %v269 = vld [vmem:[%s2 + $0x18] sm:$0xff]
      %v270 = vld [vmem:[%s2 + $0x20] sm:$0xff]
      %v271 = vld [vmem:[%s2 + $0x28] sm:$0xff]
      %v272 = vld [vmem:[%s2 + $0x30] sm:$0xff]
      %v273 = vld [vmem:[%s2 + $0x38] sm:$0xff]
      %v274 = vld [vmem:[%s2 + $0x40] sm:$0xff]
      %v275 = vld [vmem:[%s2 + $0x48] sm:$0xff]
      %v276 = vld [vmem:[%s2 + $0x50] sm:$0xff]
      %v277 = vld [vmem:[%s2 + $0x58] sm:$0xff]
      %v278 = vld [vmem:[%s2 + $0x60] sm:$0xff]
      %v279 = vld [vmem:[%s2 + $0x68] sm:$0xff]
      %v280 = vld [vmem:[%s2 + $0x70] sm:$0xff]
      %v281 = vld [vmem:[%s2 + $0x78] sm:$0xff]
      %v282 = vld [vmem:[%s3] sm:$0xff]
      %v283 = vld [vmem:[%s3 + $0x8] sm:$0xff]
      %v284 = vld [vmem:[%s3 + $0x10] sm:$0xff]
      %v285 = vld [vmem:[%s3 + $0x18] sm:$0xff]
      %v286 = vld [vmem:[%s3 + $0x20] sm:$0xff]
      %v287 = vld [vmem:[%s3 + $0x28] sm:$0xff]
      %v288 = vld [vmem:[%s3 + $0x30] sm:$0xff]
      %v289 = vld [vmem:[%s3 + $0x38] sm:$0xff]
      %v290 = vld [vmem:[%s3 + $0x40] sm:$0xff]
      %v291 = vld [vmem:[%s3 + $0x48] sm:$0xff]
      %v292 = vld [vmem:[%s3 + $0x50] sm:$0xff]
      %v293 = vld [vmem:[%s3 + $0x58] sm:$0xff]
      %v294 = vld [vmem:[%s3 + $0x60] sm:$0xff]
      %v295 = vld [vmem:[%s3 + $0x68] sm:$0xff]
      %v296 = vld [vmem:[%s3 + $0x70] sm:$0xff]
      %v297 = vld [vmem:[%s3 + $0x78] sm:$0xff]
      %298 = vmatprep.subr.mxu0 0.0
      %299 = vmatpush1.msra.mxu0 %v282
      %300 = vmatprep.subr.mxu0 0.0
      %301 = vmatpush1.msra.mxu0 %v283
      %302 = vmatprep.subr.mxu0 0.0
      %303 = vmatpush1.msra.mxu0 %v284
      %304 = vmatprep.subr.mxu0 0.0
      %305 = vmatpush1.msra.mxu0 %v285
      %306 = vmatprep.subr.mxu0 0.0
      %307 = vmatpush1.msra.mxu0 %v286
      %308 = vmatprep.subr.mxu0 0.0
      %309 = vmatpush1.msra.mxu0 %v287
      %310 = vmatprep.subr.mxu0 0.0
      %311 = vmatpush1.msra.mxu0 %v288
      %312 = vmatprep.subr.mxu0 0.0
      %313 = vmatpush1.msra.mxu0 %v289
      %314 = vmatprep.subr.mxu0 0.0
      %315 = vmatpush1.msra.mxu0 %v290
      %316 = vmatprep.subr.mxu0 0.0
      %317 = vmatpush1.msra.mxu0 %v291
      %318 = vmatprep.subr.mxu0 0.0
      %319 = vmatpush1.msra.mxu0 %v292
      %320 = vmatprep.subr.mxu0 0.0
      %321 = vmatpush1.msra.mxu0 %v293
      %322 = vmatprep.subr.mxu0 0.0
      %323 = vmatpush1.msra.mxu0 %v294
      %324 = vmatprep.subr.mxu0 0.0
      %325 = vmatpush1.msra.mxu0 %v295
      %326 = vmatprep.subr.mxu0 0.0
      %327 = vmatpush1.msra.mxu0 %v296
      %328 = vmatprep.subr.mxu0 0.0
      %329 = vmatpush1.msra.mxu0 %v297
      %330 = vmatprep.subr.mxu0 0.0
      %331 = vmatpush1.msra.mxu0 0.0
      %332 = vmatprep.subr.mxu0 0.0
      %333 = vmatpush1.msra.mxu0 0.0
      %334 = vmatprep.subr.mxu0 0.0
      %335 = vmatpush1.msra.mxu0 0.0
      %336 = vmatprep.subr.mxu0 0.0
      %337 = vmatpush1.msra.mxu0 0.0
      %338 = vmatprep.subr.mxu0 0.0
      %339 = vmatpush1.msra.mxu0 0.0
      %340 = vmatprep.subr.mxu0 0.0
      %341 = vmatpush1.msra.mxu0 0.0
      %342 = vmatprep.subr.mxu0 0.0
      %343 = vmatpush1.msra.mxu0 0.0
      %344 = vmatprep.subr.mxu0 0.0
      %345 = vmatpush1.msra.mxu0 0.0
      %346 = vmatprep.subr.mxu0 0.0
      %347 = vmatpush1.msra.mxu0 0.0
      %348 = vmatprep.subr.mxu0 0.0
      %349 = vmatpush1.msra.mxu0 0.0
      %350 = vmatprep.subr.mxu0 0.0
      %351 = vmatpush1.msra.mxu0 0.0
      %352 = vmatprep.subr.mxu0 0.0
      %353 = vmatpush1.msra.mxu0 0.0
      %354 = vmatprep.subr.mxu0 0.0
      %355 = vmatpush1.msra.mxu0 0.0
      %356 = vmatprep.subr.mxu0 0.0
      %357 = vmatpush1.msra.mxu0 0.0
      %358 = vmatprep.subr.mxu0 0.0
      %359 = vmatpush1.msra.mxu0 0.0
      %360 = vmatprep.subr.mxu0 0.0
      %361 = vmatpush1.msra.mxu0 0.0
      %362 = vmatprep.mubr.f32.mxu0 0.0
      %363 = vmatmul.mubr.f32.gmra.mrb[0].mxu0 %v258
      %v364 = vpop.f32.mrb[0].mxu0
      %v365 = vadd.f32 0.0, %v364
      %v366 = vpop.f32.mrb[0].mxu0
      %367 = vmatprep.mubr.f32.mxu0 0.0
      %368 = vmatmul.mubr.f32.gmra.mrb[0].mxu0 %v259
      %v369 = vpop.f32.mrb[0].mxu0
      %v370 = vadd.f32 0.0, %v369
      %v371 = vpop.f32.mrb[0].mxu0
      %372 = vmatprep.mubr.f32.mxu0 0.0
      %373 = vmatmul.mubr.f32.gmra.mrb[0].mxu0 %v260
      %v374 = vpop.f32.mrb[0].mxu0
      %v375 = vadd.f32 0.0, %v374
      %v376 = vpop.f32.mrb[0].mxu0
      %377 = vmatprep.mubr.f32.mxu0 0.0
      %378 = vmatmul.mubr.f32.gmra.mrb[0].mxu0 %v261
      %v379 = vpop.f32.mrb[0].mxu0
      %v380 = vadd.f32 0.0, %v379
      %v381 = vpop.f32.mrb[0].mxu0
      %382 = vmatprep.mubr.f32.mxu0 0.0
      %383 = vmatmul.mubr.f32.gmra.mrb[0].mxu0 %v262
      %v384 = vpop.f32.mrb[0].mxu0
      %v385 = vadd.f32 0.0, %v384
      %v386 = vpop.f32.mrb[0].mxu0
      %387 = vmatprep.mubr.f32.mxu0 0.0
      %388 = vmatmul.mubr.f32.gmra.mrb[0].mxu0 %v263
      %v389 = vpop.f32.mrb[0].mxu0
      %v390 = vadd.f32 0.0, %v389
      %v391 = vpop.f32.mrb[0].mxu0
      %392 = vmatprep.mubr.f32.mxu0 0.0
      %393 = vmatmul.mubr.f32.gmra.mrb[0].mxu0 %v264
      %v394 = vpop.f32.mrb[0].mxu0
      %v395 = vadd.f32 0.0, %v394
      %v396 = vpop.f32.mrb[0].mxu0
      %397 = vmatprep.mubr.f32.mxu0 0.0
      %398 = vmatmul.mubr.f32.gmra.mrb[0].mxu0 %v265
      %v399 = vpop.f32.mrb[0].mxu0
      %v400 = vadd.f32 0.0, %v399
      %v401 = vpop.f32.mrb[0].mxu0
      %402 = vdwg.mxu0
      %403 = vmatprep.subr.mxu0 0.0
      %404 = vmatpush1.msra.mxu0 %v266
      %405 = vmatprep.subr.mxu0 0.0
      %406 = vmatpush1.msra.mxu0 %v267
      %407 = vmatprep.subr.mxu0 0.0
      %408 = vmatpush1.msra.mxu0 %v268
      %409 = vmatprep.subr.mxu0 0.0
      %410 = vmatpush1.msra.mxu0 %v269
      %411 = vmatprep.subr.mxu0 0.0
      %412 = vmatpush1.msra.mxu0 %v270
      %413 = vmatprep.subr.mxu0 0.0
      %414 = vmatpush1.msra.mxu0 %v271
      %415 = vmatprep.subr.mxu0 0.0
      %416 = vmatpush1.msra.mxu0 %v272
      %417 = vmatprep.subr.mxu0 0.0
      %418 = vmatpush1.msra.mxu0 %v273
      %419 = vmatprep.subr.mxu0 0.0
      %420 = vmatpush1.msra.mxu0 %v274
      %421 = vmatprep.subr.mxu0 0.0
      %422 = vmatpush1.msra.mxu0 %v275
      %423 = vmatprep.subr.mxu0 0.0
      %424 = vmatpush1.msra.mxu0 %v276
      %425 = vmatprep.subr.mxu0 0.0
      %426 = vmatpush1.msra.mxu0 %v277
      %427 = vmatprep.subr.mxu0 0.0
      %428 = vmatpush1.msra.mxu0 %v278
      %429 = vmatprep.subr.mxu0 0.0
      %430 = vmatpush1.msra.mxu0 %v279
      %431 = vmatprep.subr.mxu0 0.0
      %432 = vmatpush1.msra.mxu0 %v280
      %433 = vmatprep.subr.mxu0 0.0
      %434 = vmatpush1.msra.mxu0 %v281
      %435 = vmatprep.subr.mxu0 0.0
      %436 = vmatpush1.msra.mxu0 0.0
      %437 = vmatprep.subr.mxu0 0.0
      %438 = vmatpush1.msra.mxu0 0.0
      %439 = vmatprep.subr.mxu0 0.0
      %440 = vmatpush1.msra.mxu0 0.0
      %441 = vmatprep.subr.mxu0 0.0
      %442 = vmatpush1.msra.mxu0 0.0
      %443 = vmatprep.subr.mxu0 0.0
      %444 = vmatpush1.msra.mxu0 0.0
      %445 = vmatprep.subr.mxu0 0.0
      %446 = vmatpush1.msra.mxu0 0.0
      %447 = vmatprep.subr.mxu0 0.0
      %448 = vmatpush1.msra.mxu0 0.0
      %449 = vmatprep.subr.mxu0 0.0
      %450 = vmatpush1.msra.mxu0 0.0
      %451 = vmatprep.subr.mxu0 0.0
      %452 = vmatpush1.msra.mxu0 0.0
      %453 = vmatprep.subr.mxu0 0.0
      %454 = vmatpush1.msra.mxu0 0.0
      %455 = vmatprep.subr.mxu0 0.0
      %456 = vmatpush1.msra.mxu0 0.0
      %457 = vmatprep.subr.mxu0 0.0
      %458 = vmatpush1.msra.mxu0 0.0
      %459 = vmatprep.subr.mxu0 0.0
      %460 = vmatpush1.msra.mxu0 0.0
      %461 = vmatprep.subr.mxu0 0.0
      %462 = vmatpush1.msra.mxu0 0.0
      %463 = vmatprep.subr.mxu0 0.0
      %464 = vmatpush1.msra.mxu0 0.0
      %465 = vmatprep.subr.mxu0 0.0
      %466 = vmatpush1.msra.mxu0 0.0
      %467 = vmatprep.mubr.f32.mxu0 0.0
      %468 = vmatmul.mubr.f32.gmra.mrb[0].mxu0 %v250
      %v469 = vpop.f32.mrb[0].mxu0
      %v470 = vadd.f32 %v365, %v469
      %v471 = vpop.f32.mrb[0].mxu0
      %472 = vmatprep.mubr.f32.mxu0 0.0
      %473 = vmatmul.mubr.f32.gmra.mrb[0].mxu0 %v251
      %v474 = vpop.f32.mrb[0].mxu0
      %v475 = vadd.f32 %v370, %v474
      %v476 = vpop.f32.mrb[0].mxu0
      %477 = vmatprep.mubr.f32.mxu0 0.0
      %478 = vmatmul.mubr.f32.gmra.mrb[0].mxu0 %v252
      %v479 = vpop.f32.mrb[0].mxu0
      %v480 = vadd.f32 %v375, %v479
      %v481 = vpop.f32.mrb[0].mxu0
      %482 = vmatprep.mubr.f32.mxu0 0.0
      %483 = vmatmul.mubr.f32.gmra.mrb[0].mxu0 %v253
      %v484 = vpop.f32.mrb[0].mxu0
      %v485 = vadd.f32 %v380, %v484
      %v486 = vpop.f32.mrb[0].mxu0
      %487 = vmatprep.mubr.f32.mxu0 0.0
      %488 = vmatmul.mubr.f32.gmra.mrb[0].mxu0 %v254
      %v489 = vpop.f32.mrb[0].mxu0
      %v490 = vadd.f32 %v385, %v489
      %v491 = vpop.f32.mrb[0].mxu0
      %492 = vmatprep.mubr.f32.mxu0 0.0
      %493 = vmatmul.mubr.f32.gmra.mrb[0].mxu0 %v255
      %v494 = vpop.f32.mrb[0].mxu0
      %v495 = vadd.f32 %v390, %v494
      %v496 = vpop.f32.mrb[0].mxu0
      %497 = vmatprep.mubr.f32.mxu0 0.0
      %498 = vmatmul.mubr.f32.gmra.mrb[0].mxu0 %v256
      %v499 = vpop.f32.mrb[0].mxu0
      %v500 = vadd.f32 %v395, %v499
      %v501 = vpop.f32.mrb[0].mxu0
      %502 = vmatprep.mubr.f32.mxu0 0.0
      %503 = vmatmul.mubr.f32.gmra.mrb[0].mxu0 %v257
      %v504 = vpop.f32.mrb[0].mxu0
      %v505 = vadd.f32 %v400, %v504
      %v506 = vpop.f32.mrb[0].mxu0
      %507 = vdwg.mxu0
      %v508 = vld [vmem:[%s4] sm:$0x1]
      %v510 = vlaneseq
      %v511 = vshrl.u32 %v510, 7
      %v512 = vsub.s32 0, %v511
      %v513 = vrot.slane %v508, %v512
      %v515 = vadd.f32 %v470, %v513
      %v516 = vadd.f32 %v475, %v513
      %v517 = vadd.f32 %v480, %v513
      %v518 = vadd.f32 %v485, %v513
      %v519 = vadd.f32 %v490, %v513
      %v520 = vadd.f32 %v495, %v513
      %v521 = vadd.f32 %v500, %v513
      %v522 = vadd.f32 %v505, %v513
      %v523 = vmax.f32 %v515, 0.0
      %v524 = vmax.f32 %v516, 0.0
      %v525 = vmax.f32 %v517, 0.0
      %v526 = vmax.f32 %v518, 0.0
      %v527 = vmax.f32 %v519, 0.0
      %v528 = vmax.f32 %v520, 0.0
      %v529 = vmax.f32 %v521, 0.0
      %v530 = vmax.f32 %v522, 0.0
      %vm531 = vcmask 64512
      %532 = vst.msk [vmem:[%s248] sm:$0xff] %vm531, %v523
      %533 = vst.msk [vmem:[%s248 + $0x8] sm:$0xff] %vm531, %v524
      %534 = vst.msk [vmem:[%s248 + $0x10] sm:$0xff] %vm531, %v525
      %535 = vst.msk [vmem:[%s248 + $0x18] sm:$0xff] %vm531, %v526
      %536 = vst.msk [vmem:[%s248 + $0x20] sm:$0xff] %vm531, %v527
      %537 = vst.msk [vmem:[%s248 + $0x28] sm:$0xff] %vm531, %v528
      %538 = vst.msk [vmem:[%s248 + $0x30] sm:$0xff] %vm531, %v529
      %539 = vst.msk [vmem:[%s248 + $0x38] sm:$0xff] %vm531, %v530
      %s540 = smul.u32 8, %s16
      %p541 = scmp.lt.s32.totalorder %s540, 15
      %s542 = scalar_select %p541, %s540, 15
      %s543 = smul.addr %s542, 8
      %s544 = scalar_lea.vmem %s5, %s543
      // Predicated region
      $region41: #{tpu_custom_call.1} parent=39 // pred_check
        %p545 = pneg %p149
      $region42: #{tpu_custom_call.1} parent=39 // pred_check_branch
        %547 = sbr.rel (%p545) target = $region44
      $region43: #{tpu_custom_call.1} parent=39 // pred_region
        %s548 = smul.u32 8, %s16
      $region44: #{tpu_custom_call.1} parent=39 // pred_fallthru
        _
    $region40: #{tpu_custom_call.1} parent=5 // pred_fallthru
      _
    %p549 = scmp.le.s32.totalorder 2, %s11
    // Predicated region
    $region45: #{tpu_custom_call.1} parent=5 // pred_check
      %p550 = pneg %p549
    $region46: #{tpu_custom_call.1} parent=5 // pred_check_branch
      %552 = sbr.rel (%p550) target = $region48
    $region47: #{tpu_custom_call.1} parent=5 // pred_region
      %s553 = ssub.s32 %s11, 2
      // Predicated region
      $region49: #{tpu_custom_call.1} parent=47 // pred_check
        %p554 = pneg %p155
      $region50: #{tpu_custom_call.1} parent=47 // pred_check_branch
        %556 = sbr.rel (%p554) target = $region52
      $region51: #{tpu_custom_call.1} parent=47 // pred_region
        %s557 = smul.u32 8, %s17
        %p558 = scmp.lt.s32.totalorder %s557, 15
        %s559 = scalar_select %p558, %s557, 15
        %s560 = smul.addr %s559, 8
        %s561 = scalar_lea.vmem %s5, %s560
      $region52: #{tpu_custom_call.1} parent=47 // pred_fallthru
        _
    $region48: #{tpu_custom_call.1} parent=5 // pred_fallthru
      _
  $region6: #{tpu_custom_call.1} parent=0 // loop_footer
    %s15 = sadd.s32 1, %s11
  $region7: #{tpu_custom_call.1} parent=0 // loop_footer_branch
    %10 = sbr.rel target = $region3
  $region8: #{tpu_custom_call.1} parent=0 // loop_exit
    _

</llo_original>
